<compile_context>
chip_gen: v5e
topology: v5e:2x2
jax: 0.10.0
libtpu: 0.0.40
codegen_flags: <defaults>
</compile_context>

<pallas_src>
import functools

import jax
import jax.numpy as jnp
from jax import lax
from jax.experimental import pallas as pl
from jax.experimental.pallas import tpu as pltpu


def _round_up(x, m):
    return ((x + m - 1) // m) * m


# ----------------------------------------------------------------------------
# Kernel: one (batch, L-tile) per grid step, channels-major (C, TL) blocks.
# ----------------------------------------------------------------------------
def _tcn_block_kernel(x_ref, w1_ref, b1_ref, w2_ref, b2_ref, *rest,
                      TL, P, P_pad, K, dilation, has_projection,
                      fused1, fused2, C_out):
    if has_projection:
        wr_ref, br_ref, o_ref, xc_ref, h1c_ref = rest
    else:
        o_ref, xc_ref, h1c_ref = rest

    j = pl.program_id(1)                       # L-tile index (sequential per batch)

    # Reset the causal carries at the first tile of every batch element.
    @pl.when(j == 0)
    def _():
        xc_ref[...] = jnp.zeros_like(xc_ref)
        h1c_ref[...] = jnp.zeros_like(h1c_ref)

    x = x_ref[0]                               # (C_in_p, TL) f32

    # Window over global time [j*TL - P_pad, j*TL + TL); concat offset P_pad is
    # a multiple of 128 -> lane-aligned concatenation.
    xwin = jnp.concatenate([xc_ref[...], x], axis=1)         # (C_in_p, P_pad + TL)

    def dilated_conv(win, w_ref, b_ref, fused):
        # Causal dilated conv over the windowed tile, then bias + ReLU.
        if fused:
            # Small per-tap contraction: stack the K tap slabs along sublanes
            # (8-aligned offsets) and run a single deep-contraction matmul.
            taps = jnp.concatenate(
                [win[:, P_pad - P + k * dilation: P_pad - P + k * dilation + TL]
                 for k in range(K)], axis=0)                  # (K*C, TL)
            acc = jnp.dot(w_ref[...], taps, preferred_element_type=jnp.float32)
        else:
            # Per-tap contraction already fills the MXU: accumulate K dots and
            # skip the concat materialization (less vreg/VMEM pressure).
            acc = None
            for k in range(K):
                t = win[:, P_pad - P + k * dilation: P_pad - P + k * dilation + TL]
                d = jnp.dot(w_ref[k], t, preferred_element_type=jnp.float32)
                acc = d if acc is None else acc + d
        return jnp.maximum(acc + b_ref[...], 0.0)

    # ---- conv1 ----
    h1 = dilated_conv(xwin, w1_ref, b1_ref, fused1)           # (C_out_p, TL)
    # Dropout(p=0.0) -> identity

    # ---- conv2 (h1 stays in vregs, no scratch round trip) ----
    h1win = jnp.concatenate([h1c_ref[...], h1], axis=1)       # (C_out_p, P_pad + TL)
    h2 = dilated_conv(h1win, w2_ref, b2_ref, fused2)

    # ---- residual: 1x1 conv only when C_in != C_out (static specialization) --
    # NOTE: cannot be fused into the conv2 matmul because h2 is ReLU'd before
    # the residual add (fusing would change semantics).
    if has_projection:
        res = jnp.dot(wr_ref[...], x, preferred_element_type=jnp.float32) + br_ref[...]
    else:
        res = x

    # Lane-dense output store (last dim = TL, multiple of 128); padded channel
    # rows are dropped statically (no-op when C_out is already 8-aligned).
    o_ref[0] = jnp.maximum(h2 + res, 0.0)[:C_out].astype(o_ref.dtype)

    # Carry the trailing P_pad columns for the next tile.  When P_pad <= TL the
    # carry comes straight from the tile values, shortening the live range of
    # the (C, P_pad+TL) window buffers.
    if P_pad <= TL:
        xc_ref[...] = x[:, TL - P_pad:]
        h1c_ref[...] = h1[:, TL - P_pad:]
    else:
        xc_ref[...] = xwin[:, TL:TL + P_pad]
        h1c_ref[...] = h1win[:, TL:TL + P_pad]


# ----------------------------------------------------------------------------
# Wrapper: layout plumbing + pallas_call
# ----------------------------------------------------------------------------
def tcn_block_forward(x, params, *, dilation, kernel_size=3, tile_len=None):
    """x: (B, C_in, L) float32 (PyTorch NCL). Returns (B, C_out, L) float32."""
    w1, b1, w2, b2, wr, br = params
    B, C_in, L = x.shape
    C_out = w1.shape[0]
    K = kernel_size
    P = (K - 1) * dilation
    assert P >= 1, "kernel_size==1 / dilation==0 degenerate case not supported"

    has_projection = (C_in != C_out)
    f32 = jnp.float32

    # Channel padding to multiples of 8 keeps sublane alignment inside the kernel.
    C_in_p = _round_up(C_in, 8)
    C_out_p = _round_up(C_out, 8)
    P_pad = _round_up(max(P, 1), 128)          # carry width, lane-aligned

    # Static matmul-shaping decision: fuse the K taps into one deep-contraction
    # matmul only while the fused contraction is below the MXU depth.
    fused1 = (K * C_in_p) < 128
    fused2 = (K * C_out_p) < 128

    # Physical VMEM of the local device (v5e/v6e: 128 MiB, v7x: 64 MiB).
    try:
        info = pltpu.get_tpu_info()
        vmem_cap = int(getattr(info, "vmem_capacity_bytes", 0)) or (64 << 20)
    except Exception:  # pragma: no cover - CPU interpret / old runtimes
        vmem_cap = 64 << 20

    def vmem_est(tl):
        # Pipelined (double-buffered) x/out blocks.
        blocks = 2 * (C_in_p * tl + C_out * tl)
        # Weights + biases (double-buffered by the pipeline even though constant).
        w_elems = C_out_p * (K * C_in_p + K * C_out_p + 2)
        if has_projection:
            w_elems += C_out_p * (C_in_p + 1)
        weights = 2 * w_elems
        # Causal carry scratches.
        carries = (C_in_p + C_out_p) * P_pad
        # In-kernel temporaries: windows, taps (fused path only), h1/h2/res.
        temps = (C_in_p + C_out_p) * (P_pad + tl)
        temps += (K if fused1 else 1) * C_in_p * tl
        temps += (K if fused2 else 1) * C_out_p * tl
        temps += 3 * C_out_p * tl
        return 4 * (blocks + weights + carries + temps)

    # L tile: multiple of 128, default up to 2048, shrunk only while the
    # estimated footprint exceeds ~40% of physical VMEM.
    Lr = _round_up(L, 128)
    if tile_len is not None:
        TL = min(_round_up(tile_len, 128), Lr)
    else:
        TL = min(2048, Lr)
    tl_budget = max(int(0.40 * vmem_cap), 8 << 20)
    while TL > 128 and vmem_est(TL) > tl_budget:
        TL = _round_up(TL // 2, 128)
    n_tiles = pl.cdiv(L, TL)                   # ragged last tile handled by Pallas

    # Input stays channels-major NCL; only pad channels when not 8-aligned
    # (no L padding, no full-array copies in the common aligned case).
    if C_in_p != C_in:
        x_in = jnp.pad(x.astype(f32), ((0, 0), (0, C_in_p - C_in), (0, 0)))
    else:
        x_in = x.astype(f32)

    # Weight folding.  fused: (C_out_p, K*C_in_p) with W[o, k*C_in_p + c] = w[o,c,k];
    # split: (K, C_out_p, C_in_p) with W[k,o,c] = w[o,c,k].
    def fold(w, cin, cin_p, fused):
        cout = w.shape[0]
        wt = jnp.pad(w.astype(f32), ((0, C_out_p - cout), (0, cin_p - cin), (0, 0)))
        if fused:
            return jnp.transpose(wt, (0, 2, 1)).reshape(C_out_p, K * cin_p)
        return jnp.transpose(wt, (2, 0, 1))

    def bias_col(b):
        return jnp.pad(b.astype(f32), (0, C_out_p - b.shape[0]))[:, None]

    operands = [x_in]
    in_specs = [pl.BlockSpec((1, C_in_p, TL), lambda b, j: (b, 0, j))]

    w1_f = fold(w1, C_in, C_in_p, fused1)
    operands.append(w1_f)
    if fused1:
        in_specs.append(pl.BlockSpec((C_out_p, K * C_in_p), lambda b, j: (0, 0)))
    else:
        in_specs.append(pl.BlockSpec((K, C_out_p, C_in_p), lambda b, j: (0, 0, 0)))
    operands.append(bias_col(b1))
    in_specs.append(pl.BlockSpec((C_out_p, 1), lambda b, j: (0, 0)))

    w2_f = fold(w2, C_out, C_out_p, fused2)
    operands.append(w2_f)
    if fused2:
        in_specs.append(pl.BlockSpec((C_out_p, K * C_out_p), lambda b, j: (0, 0)))
    else:
        in_specs.append(pl.BlockSpec((K, C_out_p, C_out_p), lambda b, j: (0, 0, 0)))
    operands.append(bias_col(b2))
    in_specs.append(pl.BlockSpec((C_out_p, 1), lambda b, j: (0, 0)))

    if has_projection:
        wr_m = jnp.pad(wr[:, :, 0].astype(f32),
                       ((0, C_out_p - C_out), (0, C_in_p - C_in)))
        operands += [wr_m, bias_col(br)]
        in_specs += [pl.BlockSpec((C_out_p, C_in_p), lambda b, j: (0, 0)),
                     pl.BlockSpec((C_out_p, 1), lambda b, j: (0, 0))]

    kernel = functools.partial(
        _tcn_block_kernel, TL=TL, P=P, P_pad=P_pad, K=K, dilation=dilation,
        has_projection=has_projection, fused1=fused1, fused2=fused2, C_out=C_out)

    # VMEM limit: actual estimate + headroom, clamped to ~85% of physical VMEM.
    vmem_limit = int(min(int(0.85 * vmem_cap),
                         max(32 << 20, vmem_est(TL) + (8 << 20))))
    vmem_limit = max(vmem_limit, 16 << 20)

    out = pl.pallas_call(
        kernel,
        out_shape=jax.ShapeDtypeStruct((B, C_out, L), f32),
        grid=(B, n_tiles),
        in_specs=in_specs,
        out_specs=pl.BlockSpec((1, C_out, TL), lambda b, j: (b, 0, j)),
        scratch_shapes=[pltpu.VMEM((C_in_p, P_pad), f32),
                        pltpu.VMEM((C_out_p, P_pad), f32)],
        compiler_params=pltpu.CompilerParams(
            dimension_semantics=("parallel", "arbitrary"),
            vmem_limit_bytes=vmem_limit),
    )(*operands)

    return out


# ----------------------------------------------------------------------------
# Deterministic parameter init (weight_norm folded: w = g * v/||v||, g = ||v||)
# ----------------------------------------------------------------------------
def init_params(key, input_dim, output_dim, kernel_size=3):
    k1, k2, k3, k4, k5, k6 = jax.random.split(key, 6)

    def weight_normed(vkey, cout, cin, k):
        v = 0.01 * jax.random.normal(vkey, (cout, cin, k), jnp.float32)
        norm = jnp.sqrt(jnp.sum(v * v, axis=(1, 2), keepdims=True))
        g = norm                                           # PyTorch init: g = ||v||
        return g * v / norm

    w1 = weight_normed(k1, output_dim, input_dim, kernel_size)
    b1 = 0.01 * jax.random.normal(k2, (output_dim,), jnp.float32)
    w2 = weight_normed(k3, output_dim, output_dim, kernel_size)
    b2 = 0.01 * jax.random.normal(k4, (output_dim,), jnp.float32)
    if input_dim != output_dim:
        wr = 0.01 * jax.random.normal(k5, (output_dim, input_dim, 1), jnp.float32)
        br = 0.01 * jax.random.normal(k6, (output_dim,), jnp.float32)
    else:
        wr = jnp.eye(output_dim, dtype=jnp.float32)[:, :, None]   # identity residual
        br = jnp.zeros((output_dim,), jnp.float32)
    return (w1, b1, w2, b2, wr, br)


# ----------------------------------------------------------------------------
# Pure-JAX reference (for correctness check)
# ----------------------------------------------------------------------------
def ref_forward(x, params, *, dilation, kernel_size=3):
    w1, b1, w2, b2, wr, br = params
    P = (kernel_size - 1) * dilation

    def causal_conv(inp, w, b):
        out = lax.conv_general_dilated(
            inp, w, window_strides=(1,), padding=[(P, P)],
            rhs_dilation=(dilation,), dimension_numbers=("NCH", "OIH", "NCH"))
        return out[:, :, :-P] + b[None, :, None]

    h1 = jax.nn.relu(causal_conv(x, w1, b1))
    h2 = jax.nn.relu(causal_conv(h1, w2, b2))
    res = lax.conv_general_dilated(
        x, wr, window_strides=(1,), padding="VALID",
        dimension_numbers=("NCH", "OIH", "NCH")) + br[None, :, None]
    return jax.nn.relu(h2 + res)


if __name__ == "__main__":
    key = jax.random.PRNGKey(0)

    # Test 1: projection residual (C_in != C_out), fused-tap path, L < 128.
    B, C_in, C_out, L = 2, 4, 8, 16
    dilation, ksize = 2, 3
    kx, kp, kx2, kp2, kx3, kp3 = jax.random.split(key, 6)
    x = jax.random.normal(kx, (B, C_in, L), jnp.float32)
    params = init_params(kp, C_in, C_out, ksize)
    out = jax.block_until_ready(
        tcn_block_forward(x, params, dilation=dilation, kernel_size=ksize))
    ref = jax.block_until_ready(
        ref_forward(x, params, dilation=dilation, kernel_size=ksize))
    assert out.shape == (B, C_out, L)
    assert jnp.allclose(out, ref, rtol=1e-4, atol=1e-5), "mismatch vs reference (test 1)"

    # Test 2: identity residual (C_in == C_out), multi-tile carry chain, ragged last tile.
    B2, C2, L2, dil2 = 2, 8, 300, 4
    x2 = jax.random.normal(kx2, (B2, C2, L2), jnp.float32)
    params2 = init_params(kp2, C2, C2, ksize)
    out2 = jax.block_until_ready(
        tcn_block_forward(x2, params2, dilation=dil2, kernel_size=ksize, tile_len=128))
    ref2 = jax.block_until_ready(
        ref_forward(x2, params2, dilation=dil2, kernel_size=ksize))
    assert out2.shape == (B2, C2, L2)
    assert jnp.allclose(out2, ref2, rtol=1e-4, atol=1e-5), "mismatch vs reference (test 2)"

    # Test 3: projection residual, per-tap (split) matmul path (K*C_p >= 128),
    #         non-8-aligned C_out, multi-tile carry, ragged last tile.
    B3, C3_in, C3_out, L3, dil3 = 1, 48, 52, 200, 2
    x3 = jax.random.normal(kx3, (B3, C3_in, L3), jnp.float32)
    params3 = init_params(kp3, C3_in, C3_out, ksize)
    out3 = jax.block_until_ready(
        tcn_block_forward(x3, params3, dilation=dil3, kernel_size=ksize, tile_len=128))
    ref3 = jax.block_until_ready(
        ref_forward(x3, params3, dilation=dil3, kernel_size=ksize))
    assert out3.shape == (B3, C3_out, L3)
    assert jnp.allclose(out3, ref3, rtol=1e-4, atol=1e-5), "mismatch vs reference (test 3)"

    print("KERNEL_OK")
</pallas_src>

<mosaic_0001>
module attributes {stable_mosaic.version = 11 : i64} {
  func.func @_tcn_block_kernel(%arg0: i32, %arg1: i32, %arg2: memref<1x8x128xf32, #tpu.memory_space<vmem>>, %arg3: memref<8x24xf32, #tpu.memory_space<vmem>>, %arg4: memref<8x1xf32, #tpu.memory_space<vmem>>, %arg5: memref<8x24xf32, #tpu.memory_space<vmem>>, %arg6: memref<8x1xf32, #tpu.memory_space<vmem>>, %arg7: memref<8x8xf32, #tpu.memory_space<vmem>>, %arg8: memref<8x1xf32, #tpu.memory_space<vmem>>, %arg9: memref<1x8x128xf32, #tpu.memory_space<vmem>>, %arg10: memref<8x128xf32, #tpu.memory_space<vmem>>, %arg11: memref<8x128xf32, #tpu.memory_space<vmem>>) attributes {dimension_semantics = [#tpu.dimension_semantics<parallel>, #tpu.dimension_semantics<arbitrary>], iteration_bounds = array<i64: 2, 1>, scalar_prefetch = 0 : i64, scratch_operands = 2 : i64, tpu.core_type = #tpu.core_type<tc>, window_params = [{transform_indices = @transform_0, window_bounds = array<i64: 1, 8, 128>}, {pipeline_mode = #tpu.pipeline_mode<synchronous>, transform_indices = @transform_1, window_bounds = array<i64: 8, 24>}, {pipeline_mode = #tpu.pipeline_mode<synchronous>, transform_indices = @transform_2, window_bounds = array<i64: 8, 1>}, {pipeline_mode = #tpu.pipeline_mode<synchronous>, transform_indices = @transform_3, window_bounds = array<i64: 8, 24>}, {pipeline_mode = #tpu.pipeline_mode<synchronous>, transform_indices = @transform_4, window_bounds = array<i64: 8, 1>}, {pipeline_mode = #tpu.pipeline_mode<synchronous>, transform_indices = @transform_5, window_bounds = array<i64: 8, 8>}, {pipeline_mode = #tpu.pipeline_mode<synchronous>, transform_indices = @transform_6, window_bounds = array<i64: 8, 1>}, {transform_indices = @transform_7, window_bounds = array<i64: 1, 8, 128>}]} {
    %c0_i32 = arith.constant 0 : i32
    %0 = arith.cmpi eq, %arg1, %c0_i32 : i32
    %1 = arith.extui %0 : i1 to i32
    %c0_i32_0 = arith.constant 0 : i32
    %2 = arith.cmpi ne, %1, %c0_i32_0 : i32
    scf.if %2 {
      %cst_31 = arith.constant 0.000000e+00 : f32
      %44 = vector.broadcast %cst_31 : f32 to vector<8x128xf32>
      %c0_32 = arith.constant 0 : index
      %c0_33 = arith.constant 0 : index
      %45 = vector.load %arg10[%c0_32, %c0_33] : memref<8x128xf32, #tpu.memory_space<vmem>>, vector<8x128xf32>
      tpu.vector_store %arg10[%c0_32, %c0_33], %44 {strides = array<i32>} : memref<8x128xf32, #tpu.memory_space<vmem>>, vector<8x128xf32>,
      %cst_34 = arith.constant 0.000000e+00 : f32
      %46 = vector.broadcast %cst_34 : f32 to vector<8x128xf32>
      %c0_35 = arith.constant 0 : index
      %c0_36 = arith.constant 0 : index
      %47 = vector.load %arg11[%c0_35, %c0_36] : memref<8x128xf32, #tpu.memory_space<vmem>>, vector<8x128xf32>
      tpu.vector_store %arg11[%c0_35, %c0_36], %46 {strides = array<i32>} : memref<8x128xf32, #tpu.memory_space<vmem>>, vector<8x128xf32>,
    } else {
    }
    %c0 = arith.constant 0 : index
    %c0_1 = arith.constant 0 : index
    %c0_2 = arith.constant 0 : index
    %3 = vector.load %arg2[%c0, %c0_1, %c0_2] : memref<1x8x128xf32, #tpu.memory_space<vmem>>, vector<1x8x128xf32>
    %4 = vector.shape_cast %3 : vector<1x8x128xf32> to vector<8x128xf32>
    %c0_3 = arith.constant 0 : index
    %c0_4 = arith.constant 0 : index
    %5 = vector.load %arg10[%c0_3, %c0_4] : memref<8x128xf32, #tpu.memory_space<vmem>>, vector<8x128xf32>
    %6 = tpu.concatenate %5, %4 in 1 : vector<8x128xf32>, vector<8x128xf32> -> vector<8x256xf32>
    %7 = vector.extract_strided_slice %6 {offsets = [0, 124], sizes = [8, 128], strides = [1, 1]} : vector<8x256xf32> to vector<8x128xf32>
    %8 = vector.extract_strided_slice %6 {offsets = [0, 126], sizes = [8, 128], strides = [1, 1]} : vector<8x256xf32> to vector<8x128xf32>
    %9 = vector.extract_strided_slice %6 {offsets = [0, 128], sizes = [8, 128], strides = [1, 1]} : vector<8x256xf32> to vector<8x128xf32>
    %10 = tpu.concatenate %7, %8, %9 in 0 : vector<8x128xf32>, vector<8x128xf32>, vector<8x128xf32> -> vector<24x128xf32>
    %c0_5 = arith.constant 0 : index
    %c0_6 = arith.constant 0 : index
    %11 = vector.load %arg3[%c0_5, %c0_6] : memref<8x24xf32, #tpu.memory_space<vmem>>, vector<8x24xf32>
    %cst = arith.constant dense<0.000000e+00> : vector<8x128xf32>
    %12 = tpu.matmul %11, %10, %cst {dimension_numbers = #tpu.dot_dimension_numbers<[1], [0], [0], [1], [0, 0, 1, 1], [], []>} : vector<8x24xf32>, vector<24x128xf32>, vector<8x128xf32> -> vector<8x128xf32>
    %c0_7 = arith.constant 0 : index
    %c0_8 = arith.constant 0 : index
    %13 = vector.load %arg4[%c0_7, %c0_8] : memref<8x1xf32, #tpu.memory_space<vmem>>, vector<8x1xf32>
    %14 = vector.broadcast %13 : vector<8x1xf32> to vector<8x128xf32>
    %15 = arith.addf %12, %14 : vector<8x128xf32>
    %cst_9 = arith.constant 0.000000e+00 : f32
    %16 = vector.broadcast %cst_9 : f32 to vector<8x128xf32>
    %17 = arith.maximumf %15, %16 : vector<8x128xf32>
    %c0_10 = arith.constant 0 : index
    %c0_11 = arith.constant 0 : index
    %18 = vector.load %arg11[%c0_10, %c0_11] : memref<8x128xf32, #tpu.memory_space<vmem>>, vector<8x128xf32>
    %19 = tpu.concatenate %18, %17 in 1 : vector<8x128xf32>, vector<8x128xf32> -> vector<8x256xf32>
    %20 = vector.extract_strided_slice %19 {offsets = [0, 124], sizes = [8, 128], strides = [1, 1]} : vector<8x256xf32> to vector<8x128xf32>
    %21 = vector.extract_strided_slice %19 {offsets = [0, 126], sizes = [8, 128], strides = [1, 1]} : vector<8x256xf32> to vector<8x128xf32>
    %22 = vector.extract_strided_slice %19 {offsets = [0, 128], sizes = [8, 128], strides = [1, 1]} : vector<8x256xf32> to vector<8x128xf32>
    %23 = tpu.concatenate %20, %21, %22 in 0 : vector<8x128xf32>, vector<8x128xf32>, vector<8x128xf32> -> vector<24x128xf32>
    %c0_12 = arith.constant 0 : index
    %c0_13 = arith.constant 0 : index
    %24 = vector.load %arg5[%c0_12, %c0_13] : memref<8x24xf32, #tpu.memory_space<vmem>>, vector<8x24xf32>
    %cst_14 = arith.constant dense<0.000000e+00> : vector<8x128xf32>
    %25 = tpu.matmul %24, %23, %cst_14 {dimension_numbers = #tpu.dot_dimension_numbers<[1], [0], [0], [1], [0, 0, 1, 1], [], []>} : vector<8x24xf32>, vector<24x128xf32>, vector<8x128xf32> -> vector<8x128xf32>
    %c0_15 = arith.constant 0 : index
    %c0_16 = arith.constant 0 : index
    %26 = vector.load %arg6[%c0_15, %c0_16] : memref<8x1xf32, #tpu.memory_space<vmem>>, vector<8x1xf32>
    %27 = vector.broadcast %26 : vector<8x1xf32> to vector<8x128xf32>
    %28 = arith.addf %25, %27 : vector<8x128xf32>
    %cst_17 = arith.constant 0.000000e+00 : f32
    %29 = vector.broadcast %cst_17 : f32 to vector<8x128xf32>
    %30 = arith.maximumf %28, %29 : vector<8x128xf32>
    %c0_18 = arith.constant 0 : index
    %c0_19 = arith.constant 0 : index
    %31 = vector.load %arg7[%c0_18, %c0_19] : memref<8x8xf32, #tpu.memory_space<vmem>>, vector<8x8xf32>
    %cst_20 = arith.constant dense<0.000000e+00> : vector<8x128xf32>
    %32 = tpu.matmul %31, %4, %cst_20 {dimension_numbers = #tpu.dot_dimension_numbers<[1], [0], [0], [1], [0, 0, 1, 1], [], []>} : vector<8x8xf32>, vector<8x128xf32>, vector<8x128xf32> -> vector<8x128xf32>
    %c0_21 = arith.constant 0 : index
    %c0_22 = arith.constant 0 : index
    %33 = vector.load %arg8[%c0_21, %c0_22] : memref<8x1xf32, #tpu.memory_space<vmem>>, vector<8x1xf32>
    %34 = vector.broadcast %33 : vector<8x1xf32> to vector<8x128xf32>
    %35 = arith.addf %32, %34 : vector<8x128xf32>
    %36 = arith.addf %30, %35 : vector<8x128xf32>
    %cst_23 = arith.constant 0.000000e+00 : f32
    %37 = vector.broadcast %cst_23 : f32 to vector<8x128xf32>
    %38 = arith.maximumf %36, %37 : vector<8x128xf32>
    %c0_24 = arith.constant 0 : index
    %c0_25 = arith.constant 0 : index
    %c0_26 = arith.constant 0 : index
    %39 = vector.load %arg9[%c0_24, %c0_25, %c0_26] : memref<1x8x128xf32, #tpu.memory_space<vmem>>, vector<1x8x128xf32>
    %40 = vector.shape_cast %39 : vector<1x8x128xf32> to vector<8x128xf32>
    %41 = vector.shape_cast %38 : vector<8x128xf32> to vector<1x8x128xf32>
    tpu.vector_store %arg9[%c0_24, %c0_25, %c0_26], %41 {strides = array<i32>} : memref<1x8x128xf32, #tpu.memory_space<vmem>>, vector<1x8x128xf32>,
    %c0_27 = arith.constant 0 : index
    %c0_28 = arith.constant 0 : index
    %42 = vector.load %arg10[%c0_27, %c0_28] : memref<8x128xf32, #tpu.memory_space<vmem>>, vector<8x128xf32>
    tpu.vector_store %arg10[%c0_27, %c0_28], %4 {strides = array<i32>} : memref<8x128xf32, #tpu.memory_space<vmem>>, vector<8x128xf32>,
    %c0_29 = arith.constant 0 : index
    %c0_30 = arith.constant 0 : index
    %43 = vector.load %arg11[%c0_29, %c0_30] : memref<8x128xf32, #tpu.memory_space<vmem>>, vector<8x128xf32>
    tpu.vector_store %arg11[%c0_29, %c0_30], %17 {strides = array<i32>} : memref<8x128xf32, #tpu.memory_space<vmem>>, vector<8x128xf32>,
    return
  }
  func.func @transform_0(%arg0: i32, %arg1: i32) -> (i32, i32, i32) {
    %c0_i32 = arith.constant 0 : i32
    %c0_i32_0 = arith.constant 0 : i32
    return %arg0, %c0_i32, %arg1 : i32, i32, i32
  }
  func.func @transform_1(%arg0: i32, %arg1: i32) -> (i32, i32) {
    %c0_i32 = arith.constant 0 : i32
    %c0_i32_0 = arith.constant 0 : i32
    %c0_i32_1 = arith.constant 0 : i32
    return %c0_i32, %c0_i32_0 : i32, i32
  }
  func.func @transform_2(%arg0: i32, %arg1: i32) -> (i32, i32) {
    %c0_i32 = arith.constant 0 : i32
    %c0_i32_0 = arith.constant 0 : i32
    %c0_i32_1 = arith.constant 0 : i32
    return %c0_i32, %c0_i32_0 : i32, i32
  }
  func.func @transform_3(%arg0: i32, %arg1: i32) -> (i32, i32) {
    %c0_i32 = arith.constant 0 : i32
    %c0_i32_0 = arith.constant 0 : i32
    %c0_i32_1 = arith.constant 0 : i32
    return %c0_i32, %c0_i32_0 : i32, i32
  }
  func.func @transform_4(%arg0: i32, %arg1: i32) -> (i32, i32) {
    %c0_i32 = arith.constant 0 : i32
    %c0_i32_0 = arith.constant 0 : i32
    %c0_i32_1 = arith.constant 0 : i32
    return %c0_i32, %c0_i32_0 : i32, i32
  }
  func.func @transform_5(%arg0: i32, %arg1: i32) -> (i32, i32) {
    %c0_i32 = arith.constant 0 : i32
    %c0_i32_0 = arith.constant 0 : i32
    %c0_i32_1 = arith.constant 0 : i32
    return %c0_i32, %c0_i32_0 : i32, i32
  }
  func.func @transform_6(%arg0: i32, %arg1: i32) -> (i32, i32) {
    %c0_i32 = arith.constant 0 : i32
    %c0_i32_0 = arith.constant 0 : i32
    %c0_i32_1 = arith.constant 0 : i32
    return %c0_i32, %c0_i32_0 : i32, i32
  }
  func.func @transform_7(%arg0: i32, %arg1: i32) -> (i32, i32, i32) {
    %c0_i32 = arith.constant 0 : i32
    %c0_i32_0 = arith.constant 0 : i32
    return %arg0, %c0_i32, %arg1 : i32, i32, i32
  }
}

</mosaic_0001>

<llo_original>
// kernel: tpu_custom_call.1
$region0: #{tpu_custom_call.1}
  #allocation0 [shape = 'u32[]', space=smem, size = 0x4, offset = 0x4, fixed_abs, tag = 'smem constant byte address 0x4 - core index']
  #allocation1 [shape = 'u32[72,128]{1,0:T(1,128)}', space=vmem, size = 0x9000, scoped, tag = 'internal scratch']
  #allocation2 [shape = 'f32[8,128]{1,0:T(8,128)}', space=vmem, size = 0x1000, scoped, tag = 'scratch operand']
  #allocation3 [shape = 'f32[8,128]{1,0:T(8,128)}', space=vmem, size = 0x1000, scoped, tag = 'scratch operand']
  %s0 = inlined_call_operand.vmem [shape: f32[2,8,16], index: 0, kind: input, shape index: {}]
  %s1 = inlined_call_operand.vmem [shape: f32[8,24], index: 1, kind: input, shape index: {}]
  %s2 = inlined_call_operand.vmem [shape: f32[8,1], index: 2, kind: input, shape index: {}]
  %s3 = inlined_call_operand.hbm [shape: f32[8,24], index: 3, kind: input, shape index: {}]
  %s4 = inlined_call_operand.vmem [shape: f32[8,1], index: 4, kind: input, shape index: {}]
  %s5 = inlined_call_operand.hbm [shape: f32[8,8], index: 5, kind: input, shape index: {}]
  %s6 = inlined_call_operand.vmem [shape: f32[8,1], index: 6, kind: input, shape index: {}]
  %s7 = inlined_call_operand.hbm [shape: f32[2,8,16], index: 7, kind: output, shape index: {}]
  %s8 = sld [smem:[#allocation0]]
  $region73: #{tpu_custom_call.1} parent=0
    _
  %s10 = ssub.s32 1, %s8
  %s11 = scalar_select 0, %s10, %s8
  $region1: #{tpu_custom_call.1} parent=0
    #allocation4 [shape = 'u8[4096]{0}', space=vmem, size = 0x1000, scoped, tag = 'input window, operand 3, single buffered']
    #allocation5 [shape = 's32[2]{0}', space=sflag, size = 0x8, scoped, tag = 'scoped memory for tpu_custom_call.1']
    #allocation6 [shape = 's32[2]{0}', space=sflag, size = 0x8, scoped, tag = 'scoped memory for tpu_custom_call.1']
    #allocation7 [shape = 'u8[4096]{0}', space=vmem, size = 0x1000, scoped, tag = 'input window, operand 5, single buffered']
    #allocation8 [shape = 's32[1]{0}', space=sflag, size = 0x4, scoped, tag = 'scoped memory for tpu_custom_call.1']
    #allocation9 [shape = 'u8[8192]{0}', space=vmem, size = 0x2000, scoped, tag = 'output window, operand 0']
    %12 = vsyncpa [#allocation5], 0
    %13 = vsyncpa [#allocation8], 0
    %14 = vsyncpa [#allocation6], 0
    %s15 = scalar_lea.sflag [#allocation6], 1
    %16 = vsyncpa %s15, 0
    loop: start=0, step=1, limit=4
    $region2: #{tpu_custom_call.1} parent=1 // loop_pre_header
      _
    $region3: #{tpu_custom_call.1} parent=1 // loop_header
      %s18 = sphi 0, %s22
      %p19 = scmp.ge.s32.totalorder %s18, 4
      %s25 = sphi 0, %s37
      %s26 = sphi 0, %s33
      %s27 = sphi 0, %s25
      %s28 = sphi 0, %s26
      %s29 = sphi 0, %s27
      %s30 = sphi 0, %s28
      %s42 = sphi 0, %s44
      %s45 = sphi 0, %s42
      %s46 = sphi 0, %s45
      %s62 = sphi 0, %s46
      %s66 = sphi 0, %s66
      %s68 = sphi 0, %s66
      %s69 = sphi 0, %s68
      %s83 = sphi 0, %s69
      %s87 = sphi 0, %s87
      %s89 = sphi 0, %s87
      %s90 = sphi 0, %s89
      %s104 = sphi 0, %s90
      %s108 = sphi 0, %s108
      %s110 = sphi 0, %s108
      %s111 = sphi 0, %s110
      %s125 = sphi 0, %s111
      %s129 = sphi 0, %s129
      %s131 = sphi 0, %s129
      %s132 = sphi 0, %s131
      %s146 = sphi 0, %s132
      %s150 = sphi 0, %s150
      %s152 = sphi 0, %s150
      %s153 = sphi 0, %s152
      %s167 = sphi 0, %s153
      %s171 = sphi 0, %s171
      %s173 = sphi 0, %s171
      %s174 = sphi 0, %s173
      %s188 = sphi 0, %s174
      %s196 = sphi 0, %s198
      %s199 = sphi 0, %s196
      %s200 = sphi 0, %s199
      %s216 = sphi 0, %s200
    $region4: #{tpu_custom_call.1} parent=1 // loop_header_branch
      %21 = sbr.rel (%p19) target = $region8
    $region5: #{tpu_custom_call.1} parent=1 // loop_body
      %s23 = ssub.s32 %s18, 1
      %s24 = ssub.s32 %s18, 2
      %s31 = sadd.s32 1, %s26
      %p32 = scmp.ge.s32.totalorder %s31, 1
      %s33 = scalar_select %p32, 0, %s31
      %s34 = sadd.s32 1, %s25
      %s35 = scalar_select %p32, %s34, %s25
      %p36 = scmp.ge.s32.totalorder %s35, 2
      %s37 = scalar_select %p36, 0, %s35
      %s38 = ssub.s32 %s25, %s37
      %s39 = ssub.s32 %s26, %s33
      %s40 = sor.u32 %s38, %s39
      %p41 = scmp.eq.s32.totalorder %s40, 0
      %s43 = sadd.s32 %s42, 1
      %s44 = scalar_select %p41, %s42, %s43
      %p47 = pneg %p41
      %p48 = scmp.eq.s32.totalorder %s18, 1
      %p49 = por %p47, %p48
      %p50 = scmp.ne.s32.totalorder %s42, %s45
      %p51 = scmp.eq.s32.totalorder %s18, 0
      %p52 = por %p50, %p51
      %p53 = scmp.ne.s32.totalorder %s42, %s45
      %p54 = scmp.eq.s32.totalorder %s23, 1
      %p55 = por %p53, %p54
      %p56 = scmp.ne.s32.totalorder %s45, %s46
      %p57 = scmp.eq.s32.totalorder %s23, 0
      %p58 = por %p56, %p57
      %p59 = scmp.ne.s32.totalorder %s45, %s46
      %p60 = scmp.eq.s32.totalorder %s24, 1
      %p61 = por %p59, %p60
      %p63 = scmp.ne.s32.totalorder %s46, %s62
      %p64 = scmp.eq.s32.totalorder %s24, 0
      %p65 = por %p63, %p64
      %s67 = sadd.s32 %s66, 1
      %p70 = scmp.eq.s32.totalorder %s18, 1
      %p71 = scmp.ne.s32.totalorder %s66, %s68
      %p72 = scmp.eq.s32.totalorder %s18, 0
      %p73 = por %p71, %p72
      %p74 = scmp.ne.s32.totalorder %s66, %s68
      %p75 = scmp.eq.s32.totalorder %s23, 1
      %p76 = por %p74, %p75
      %p77 = scmp.ne.s32.totalorder %s68, %s69
      %p78 = scmp.eq.s32.totalorder %s23, 0
      %p79 = por %p77, %p78
      %p80 = scmp.ne.s32.totalorder %s68, %s69
      %p81 = scmp.eq.s32.totalorder %s24, 1
      %p82 = por %p80, %p81
      %p84 = scmp.ne.s32.totalorder %s69, %s83
      %p85 = scmp.eq.s32.totalorder %s24, 0
      %p86 = por %p84, %p85
      %s88 = sadd.s32 %s87, 1
      %p91 = scmp.eq.s32.totalorder %s18, 1
      %p92 = scmp.ne.s32.totalorder %s87, %s89
      %p93 = scmp.eq.s32.totalorder %s18, 0
      %p94 = por %p92, %p93
      %p95 = scmp.ne.s32.totalorder %s87, %s89
      %p96 = scmp.eq.s32.totalorder %s23, 1
      %p97 = por %p95, %p96
      %p98 = scmp.ne.s32.totalorder %s89, %s90
      %p99 = scmp.eq.s32.totalorder %s23, 0
      %p100 = por %p98, %p99
      %p101 = scmp.ne.s32.totalorder %s89, %s90
      %p102 = scmp.eq.s32.totalorder %s24, 1
      %p103 = por %p101, %p102
      %p105 = scmp.ne.s32.totalorder %s90, %s104
      %p106 = scmp.eq.s32.totalorder %s24, 0
      %p107 = por %p105, %p106
      %s109 = sadd.s32 %s108, 1
      %p112 = scmp.eq.s32.totalorder %s18, 1
      %p113 = scmp.ne.s32.totalorder %s108, %s110
      %p114 = scmp.eq.s32.totalorder %s18, 0
      %p115 = por %p113, %p114
      %p116 = scmp.ne.s32.totalorder %s108, %s110
      %p117 = scmp.eq.s32.totalorder %s23, 1
      %p118 = por %p116, %p117
      %p119 = scmp.ne.s32.totalorder %s110, %s111
      %p120 = scmp.eq.s32.totalorder %s23, 0
      %p121 = por %p119, %p120
      %p122 = scmp.ne.s32.totalorder %s110, %s111
      %p123 = scmp.eq.s32.totalorder %s24, 1
      %p124 = por %p122, %p123
      %p126 = scmp.ne.s32.totalorder %s111, %s125
      %p127 = scmp.eq.s32.totalorder %s24, 0
      %p128 = por %p126, %p127
      %s130 = sadd.s32 %s129, 1
      %p133 = scmp.eq.s32.totalorder %s18, 1
      %p134 = scmp.ne.s32.totalorder %s129, %s131
      %p135 = scmp.eq.s32.totalorder %s18, 0
      %p136 = por %p134, %p135
      %p137 = scmp.ne.s32.totalorder %s129, %s131
      %p138 = scmp.eq.s32.totalorder %s23, 1
      %p139 = por %p137, %p138
      %p140 = scmp.ne.s32.totalorder %s131, %s132
      %p141 = scmp.eq.s32.totalorder %s23, 0
      %p142 = por %p140, %p141
      %p143 = scmp.ne.s32.totalorder %s131, %s132
      %p144 = scmp.eq.s32.totalorder %s24, 1
      %p145 = por %p143, %p144
      %p147 = scmp.ne.s32.totalorder %s132, %s146
      %p148 = scmp.eq.s32.totalorder %s24, 0
      %p149 = por %p147, %p148
      %s151 = sadd.s32 %s150, 1
      %p154 = scmp.eq.s32.totalorder %s18, 1
      %p155 = scmp.ne.s32.totalorder %s150, %s152
      %p156 = scmp.eq.s32.totalorder %s18, 0
      %p157 = por %p155, %p156
      %p158 = scmp.ne.s32.totalorder %s150, %s152
      %p159 = scmp.eq.s32.totalorder %s23, 1
      %p160 = por %p158, %p159
      %p161 = scmp.ne.s32.totalorder %s152, %s153
      %p162 = scmp.eq.s32.totalorder %s23, 0
      %p163 = por %p161, %p162
      %p164 = scmp.ne.s32.totalorder %s152, %s153
      %p165 = scmp.eq.s32.totalorder %s24, 1
      %p166 = por %p164, %p165
      %p168 = scmp.ne.s32.totalorder %s153, %s167
      %p169 = scmp.eq.s32.totalorder %s24, 0
      %p170 = por %p168, %p169
      %s172 = sadd.s32 %s171, 1
      %p175 = scmp.eq.s32.totalorder %s18, 1
      %p176 = scmp.ne.s32.totalorder %s171, %s173
      %p177 = scmp.eq.s32.totalorder %s18, 0
      %p178 = por %p176, %p177
      %p179 = scmp.ne.s32.totalorder %s171, %s173
      %p180 = scmp.eq.s32.totalorder %s23, 1
      %p181 = por %p179, %p180
      %p182 = scmp.ne.s32.totalorder %s173, %s174
      %p183 = scmp.eq.s32.totalorder %s23, 0
      %p184 = por %p182, %p183
      %p185 = scmp.ne.s32.totalorder %s173, %s174
      %p186 = scmp.eq.s32.totalorder %s24, 1
      %p187 = por %p185, %p186
      %p189 = scmp.ne.s32.totalorder %s174, %s188
      %p190 = scmp.eq.s32.totalorder %s24, 0
      %p191 = por %p189, %p190
      %s192 = ssub.s32 %s25, %s37
      %s193 = ssub.s32 %s26, %s33
      %s194 = sor.u32 %s192, %s193
      %p195 = scmp.eq.s32.totalorder %s194, 0
      %s197 = sadd.s32 %s196, 1
      %s198 = scalar_select %p195, %s196, %s197
      %p201 = pneg %p195
      %p202 = scmp.eq.s32.totalorder %s18, 1
      %p203 = por %p201, %p202
      %p204 = scmp.ne.s32.totalorder %s196, %s199
      %p205 = scmp.eq.s32.totalorder %s18, 0
      %p206 = por %p204, %p205
      %p207 = scmp.ne.s32.totalorder %s196, %s199
      %p208 = scmp.eq.s32.totalorder %s23, 1
      %p209 = por %p207, %p208
      %p210 = scmp.ne.s32.totalorder %s199, %s200
      %p211 = scmp.eq.s32.totalorder %s23, 0
      %p212 = por %p210, %p211
      %p213 = scmp.ne.s32.totalorder %s199, %s200
      %p214 = scmp.eq.s32.totalorder %s24, 1
      %p215 = por %p213, %p214
      %p217 = scmp.ne.s32.totalorder %s200, %s216
      %p218 = scmp.eq.s32.totalorder %s24, 0
      %p219 = por %p217, %p218
      %p220 = scmp.le.s32.totalorder 1, %s18
      %p221 = scmp.lt.s32.totalorder %s18, 3
      %p222 = pnand %p220, %p221
      %p223 = pneg %p222
      // Predicated region
      $region9: #{tpu_custom_call.1} parent=5 // pred_check
        _
      $region10: #{tpu_custom_call.1} parent=5 // pred_check_branch
        %225 = sbr.rel (%p222) target = $region12
      $region11: #{tpu_custom_call.1} parent=5 // pred_region
        %s226 = ssub.s32 %s18, 1
        // Predicated region
        $region13: #{tpu_custom_call.1} parent=11 // pred_check
          %p227 = pneg %p79
        $region14: #{tpu_custom_call.1} parent=11 // pred_check_branch
          %229 = sbr.rel (%p227) target = $region16
        $region15: #{tpu_custom_call.1} parent=11 // pred_region
          _
        $region16: #{tpu_custom_call.1} parent=11 // pred_fallthru
          _
        // Predicated region
        $region17: #{tpu_custom_call.1} parent=11 // pred_check
          %p230 = pneg %p100
        $region18: #{tpu_custom_call.1} parent=11 // pred_check_branch
          %232 = sbr.rel (%p230) target = $region20
        $region19: #{tpu_custom_call.1} parent=11 // pred_region
          _
        $region20: #{tpu_custom_call.1} parent=11 // pred_fallthru
          _
        // Predicated region
        $region21: #{tpu_custom_call.1} parent=11 // pred_check
          %p233 = pneg %p121
        $region22: #{tpu_custom_call.1} parent=11 // pred_check_branch
          %235 = sbr.rel (%p233) target = $region24
        $region23: #{tpu_custom_call.1} parent=11 // pred_region
          %237 = vsyncadd [#allocation5], 0
          %s239 = sshll.u32 %s3, 4
          %s240 = int_to_ptr.hbm [resolvable:$true] %s239
          %s241 = sshll.u32 [#allocation4], 4
          %s242 = int_to_ptr.vmem [resolvable:$true] %s241
          %244 = dma.hbm_to_vmem [thread:$0]  %s240, 128, %s242, [#allocation5]
        $region24: #{tpu_custom_call.1} parent=11 // pred_fallthru
          _
        // Predicated region
        $region25: #{tpu_custom_call.1} parent=11 // pred_check
          %p245 = pneg %p142
        $region26: #{tpu_custom_call.1} parent=11 // pred_check_branch
          %247 = sbr.rel (%p245) target = $region28
        $region27: #{tpu_custom_call.1} parent=11 // pred_region
          _
        $region28: #{tpu_custom_call.1} parent=11 // pred_fallthru
          _
        // Predicated region
        $region29: #{tpu_custom_call.1} parent=11 // pred_check
          %p248 = pneg %p163
        $region30: #{tpu_custom_call.1} parent=11 // pred_check_branch
          %250 = sbr.rel (%p248) target = $region32
        $region31: #{tpu_custom_call.1} parent=11 // pred_region
          %252 = vsyncadd [#allocation8], 0
          %s254 = sshll.u32 %s5, 4
          %s255 = int_to_ptr.hbm [resolvable:$true] %s254
          %s256 = sshll.u32 [#allocation7], 4
          %s257 = int_to_ptr.vmem [resolvable:$true] %s256
          %259 = dma.hbm_to_vmem [thread:$0]  %s255, 128, %s257, [#allocation8]
        $region32: #{tpu_custom_call.1} parent=11 // pred_fallthru
          _
        // Predicated region
        $region33: #{tpu_custom_call.1} parent=11 // pred_check
          %p260 = pneg %p184
        $region34: #{tpu_custom_call.1} parent=11 // pred_check_branch
          %262 = sbr.rel (%p260) target = $region36
        $region35: #{tpu_custom_call.1} parent=11 // pred_region
          _
        $region36: #{tpu_custom_call.1} parent=11 // pred_fallthru
          _
      $region12: #{tpu_custom_call.1} parent=5 // pred_fallthru
        _
      %p263 = scmp.lt.s32.totalorder %s18, 2
      // Predicated region
      $region37: #{tpu_custom_call.1} parent=5 // pred_check
        %p264 = pneg %p263
      $region38: #{tpu_custom_call.1} parent=5 // pred_check_branch
        %266 = sbr.rel (%p264) target = $region40
      $region39: #{tpu_custom_call.1} parent=5 // pred_region
        // Predicated region
        $region41: #{tpu_custom_call.1} parent=39 // pred_check
          %p267 = pneg %p52
        $region42: #{tpu_custom_call.1} parent=39 // pred_check_branch
          %269 = sbr.rel (%p267) target = $region44
        $region43: #{tpu_custom_call.1} parent=39 // pred_region
          %p270 = scmp.lt.s32.totalorder %s25, 1
          %s271 = scalar_select %p270, %s25, 1
          %p272 = scmp.lt.s32.totalorder %s26, 0
          %s273 = scalar_select %p272, %s26, 0
          %s274 = sadd.s32 %s273, %s271
          %s275 = smul.addr %s274, 8
          %s276 = scalar_lea.vmem %s0, %s275
        $region44: #{tpu_custom_call.1} parent=39 // pred_fallthru
          _
      $region40: #{tpu_custom_call.1} parent=5 // pred_fallthru
        _
      %p277 = scmp.le.s32.totalorder 1, %s18
      %p278 = scmp.lt.s32.totalorder %s18, 3
      %p279 = pnand %p277, %p278
      %p280 = pneg %p279
      // Predicated region
      $region45: #{tpu_custom_call.1} parent=5 // pred_check
        _
      $region46: #{tpu_custom_call.1} parent=5 // pred_check_branch
        %282 = sbr.rel (%p279) target = $region48
      $region47: #{tpu_custom_call.1} parent=5 // pred_region
        %s283 = ssub.s32 %s18, 1
        // Predicated region
        $region49: #{tpu_custom_call.1} parent=47 // pred_check
          %p284 = pneg %p121
        $region50: #{tpu_custom_call.1} parent=47 // pred_check_branch
          %286 = sbr.rel (%p284) target = $region52
        $region51: #{tpu_custom_call.1} parent=47 // pred_region
          %288 = dma.done [#allocation5], 128
        $region52: #{tpu_custom_call.1} parent=47 // pred_fallthru
          _
        // Predicated region
        $region53: #{tpu_custom_call.1} parent=47 // pred_check
          %p289 = pneg %p163
        $region54: #{tpu_custom_call.1} parent=47 // pred_check_branch
          %291 = sbr.rel (%p289) target = $region56
        $region55: #{tpu_custom_call.1} parent=47 // pred_region
          %293 = dma.done [#allocation8], 128
        $region56: #{tpu_custom_call.1} parent=47 // pred_fallthru
          _
        %p294 = scmp.lt.s32.totalorder %s27, 1
        %s295 = scalar_select %p294, %s27, 1
        %p296 = scmp.lt.s32.totalorder %s28, 0
        %s297 = scalar_select %p296, %s28, 0
        %s298 = sadd.s32 %s297, %s295
        %s299 = smul.addr %s298, 8
        %s300 = scalar_lea.vmem %s0, %s299
        %p301 = pneg %p58
        %p302 = pneg %p55
        %p303 = pneg %p79
        %p304 = pneg %p76
        %p305 = pneg %p100
        %p306 = pneg %p97
        %p307 = pneg %p121
        %p308 = pneg %p118
        %p309 = pneg %p142
        %p310 = pneg %p139
        %p311 = pneg %p163
        %p312 = pneg %p160
        %p313 = pneg %p184
        %p314 = pneg %p181
        %p315 = pneg %p212
        %p316 = pneg %p209
        %s317 = sand.u32 %s199, 1
        %s318 = scalar_lea.sflag [#allocation6], %s317
        %s319 = sand.u32 %s199, 1
        %s320 = smul.addr %s319, 8
        %s321 = scalar_lea.vmem [#allocation9], %s320
        %p322 = scmp.lt.s32.totalorder %s27, 1
        %s323 = scalar_select %p322, %s27, 1
        %p324 = scmp.lt.s32.totalorder %s28, 0
        %s325 = scalar_select %p324, %s28, 0
        %s326 = sadd.s32 %s325, %s323
        %s327 = smul.addr %s326, 8
        %s328 = scalar_lea.vmem %s0, %s327
        %p329 = scmp.eq.s32.totalorder %s28, 0
        // Predicated region
        $region57: #{tpu_custom_call.1} parent=47 // pred_check
          %p330 = pneg %p329
        $region58: #{tpu_custom_call.1} parent=47 // pred_check_branch
          %332 = sbr.rel (%p330) target = $region60
        $region59: #{tpu_custom_call.1} parent=47 // pred_region
          %333 = vst [vmem:[#allocation2] sm:$0xff] 0.0
          %334 = vst [vmem:[#allocation3] sm:$0xff] 0.0
        $region60: #{tpu_custom_call.1} parent=47 // pred_fallthru
          _
        %v335 = vld [vmem:[%s328] sm:$0xff]
        %v336 = vld [vmem:[#allocation2] sm:$0xff]
        %339 = vrot.lane.b32.xlu0 %v336, 126
        %v340 = vpop.permute.xlu0 %339
        %341 = vrot.lane.b32.xlu0 %v335, 126
        %v342 = vpop.permute.xlu0 %341
        %vm343 = vcmask 1031168
        %v344 = vsel %vm343, %v340, %v342
        %345 = vrot.lane.b32.xlu0 %v335, 124
        %v346 = vpop.permute.xlu0 %345
        %v347 = vld [vmem:[%s1] sm:$0xff]
        %v348 = vld [vmem:[%s2] sm:$0xff]
        %350 = vset.pattern.permute.xlu0 0
        %351 = vperm.xlu0 %350, %v348
        %v352 = vpop.permute.xlu0 %351
        %354 = vrot.lane.b32.xlu0 %v336, 4
        %v355 = vpop.permute.xlu0 %354
        %356 = vrot.lane.b32.xlu0 %v335, 4
        %v357 = vpop.permute.xlu0 %356
        %358 = vrot.lane.b32.xlu0 %v344, 4
        %v359 = vpop.permute.xlu0 %358
        %360 = vrot.lane.b32.xlu0 %v342, 4
        %v361 = vpop.permute.xlu0 %360
        %362 = vrot.lane.b32.xlu0 %v346, 4
        %v363 = vpop.permute.xlu0 %362
        %vm364 = vcmask 31744
        %v365 = vsel %vm364, %v355, %v357
        %v366 = vsel %vm364, %v359, %v361
        %vm370 = vcmask 195584
        %v372 = vsel %vm370, %v347, 0
        %374 = vmatpush.msra.mxu0 0.0
        %375 = vmatpush.msra.mxu0 0.0
        %376 = vmatpush.msra.mxu0 0.0
        %377 = vmatpush.msra.mxu0 0.0
        %378 = vmatpush.msra.mxu0 0.0
        %379 = vmatpush.msra.mxu0 0.0
        %380 = vmatpush.msra.mxu0 0.0
        %381 = vmatpush.msra.mxu0 0.0
        %382 = vmatpush.msra.mxu0 0.0
        %383 = vmatpush.msra.mxu0 0.0
        %384 = vmatpush.msra.mxu0 0.0
        %385 = vmatpush.msra.mxu0 0.0
        %386 = vmatpush.msra.mxu0 0.0
        %387 = vmatpush.msra.mxu0 %v363
        %388 = vmatpush.msra.mxu0 %v366
        %389 = vmatpush.msra.mxu0 %v365
        %390 = vmatmul.f32.gmra.mxu0 %v372
        %v391 = vpop.f32.mrf.mxu0
        %v392 = vadd.f32 %v352, %v391
        %393 = vdwg.mxu0
        %v394 = vmax.f32 %v392, 0.0
        %v395 = vld [vmem:[#allocation3] sm:$0xff]
        %398 = vrot.lane.b32.xlu0 %v395, 126
        %v399 = vpop.permute.xlu0 %398
        %400 = vrot.lane.b32.xlu0 %v394, 126
        %v401 = vpop.permute.xlu0 %400
        %v402 = vsel %vm343, %v399, %v401
        %403 = vrot.lane.b32.xlu0 %v394, 124
        %v404 = vpop.permute.xlu0 %403
        %v405 = vld [vmem:[#allocation4] sm:$0xff]
        %v406 = vld [vmem:[%s4] sm:$0xff]
        %408 = vset.pattern.permute.xlu0 0
        %409 = vperm.xlu0 %408, %v406
        %v410 = vpop.permute.xlu0 %409
        %412 = vrot.lane.b32.xlu0 %v395, 4
        %v413 = vpop.permute.xlu0 %412
        %414 = vrot.lane.b32.xlu0 %v394, 4
        %v415 = vpop.permute.xlu0 %414
        %416 = vrot.lane.b32.xlu0 %v402, 4
        %v417 = vpop.permute.xlu0 %416
        %418 = vrot.lane.b32.xlu0 %v401, 4
        %v419 = vpop.permute.xlu0 %418
        %420 = vrot.lane.b32.xlu0 %v404, 4
        %v421 = vpop.permute.xlu0 %420
        %v422 = vsel %vm364, %v413, %v415
        %v423 = vsel %vm364, %v417, %v419
        %v428 = vsel %vm370, %v405, 0
        %430 = vmatpush.msra.mxu0 0.0
        %431 = vmatpush.msra.mxu0 0.0
        %432 = vmatpush.msra.mxu0 0.0
        %433 = vmatpush.msra.mxu0 0.0
        %434 = vmatpush.msra.mxu0 0.0
        %435 = vmatpush.msra.mxu0 0.0
        %436 = vmatpush.msra.mxu0 0.0
        %437 = vmatpush.msra.mxu0 0.0
        %438 = vmatpush.msra.mxu0 0.0
        %439 = vmatpush.msra.mxu0 0.0
        %440 = vmatpush.msra.mxu0 0.0
        %441 = vmatpush.msra.mxu0 0.0
        %442 = vmatpush.msra.mxu0 0.0
        %443 = vmatpush.msra.mxu0 %v421
        %444 = vmatpush.msra.mxu0 %v423
        %445 = vmatpush.msra.mxu0 %v422
        %446 = vmatmul.f32.gmra.mxu0 %v428
        %v447 = vpop.f32.mrf.mxu0
        %v448 = vadd.f32 %v410, %v447
        %449 = vdwg.mxu0
        %v450 = vmax.f32 %v448, 0.0
        %v451 = vld [vmem:[#allocation7] sm:$0xff]
        %v452 = vld [vmem:[%s6] sm:$0xff]
        %454 = vset.pattern.permute.xlu0 0
        %455 = vperm.xlu0 %454, %v452
        %v456 = vpop.permute.xlu0 %455
        %vm458 = vcmask 64512
        %v460 = vsel %vm458, %v451, 0
        %462 = vmatpush.msra.mxu0 0.0
        %463 = vmatpush.msra.mxu0 0.0
        %464 = vmatpush.msra.mxu0 0.0
        %465 = vmatpush.msra.mxu0 0.0
        %466 = vmatpush.msra.mxu0 0.0
        %467 = vmatpush.msra.mxu0 0.0
        %468 = vmatpush.msra.mxu0 0.0
        %469 = vmatpush.msra.mxu0 0.0
        %470 = vmatpush.msra.mxu0 0.0
        %471 = vmatpush.msra.mxu0 0.0
        %472 = vmatpush.msra.mxu0 0.0
        %473 = vmatpush.msra.mxu0 0.0
        %474 = vmatpush.msra.mxu0 0.0
        %475 = vmatpush.msra.mxu0 0.0
        %476 = vmatpush.msra.mxu0 0.0
        %477 = vmatpush.msra.mxu0 %v335
        %478 = vmatmul.f32.gmra.mxu0 %v460
        %v479 = vpop.f32.mrf.mxu0
        %v480 = vadd.f32 %v456, %v479
        %481 = vdwg.mxu0
        %v482 = vadd.f32 %v450, %v480
        %v483 = vmax.f32 %v482, 0.0
        %484 = vst [vmem:[%s321] sm:$0xff] %v483
        %485 = vst [vmem:[#allocation2] sm:$0xff] %v335
        %486 = vst [vmem:[#allocation3] sm:$0xff] %v394
        %s487 = sand.u32 %s199, 1
        %s488 = scalar_lea.sflag [#allocation6], %s487
        %s489 = sand.u32 %s199, 1
        %s490 = smul.addr %s489, 8
        %s491 = scalar_lea.vmem [#allocation9], %s490
        // Predicated region
        $region61: #{tpu_custom_call.1} parent=47 // pred_check
          %p492 = pneg %p209
        $region62: #{tpu_custom_call.1} parent=47 // pred_check_branch
          %494 = sbr.rel (%p492) target = $region64
        $region63: #{tpu_custom_call.1} parent=47 // pred_region
          %496 = vsyncadd %s488, 0
          %s497 = sadd.s32 %s28, %s27
          %s498 = smul.addr %s497, 8
          %s499 = scalar_lea.hbm %s7, %s498
          %s501 = sshll.u32 %s491, 4
          %s502 = int_to_ptr.vmem [resolvable:$true] %s501
          %s503 = sshll.u32 %s499, 4
          %s504 = int_to_ptr.hbm [resolvable:$true] %s503
          %506 = dma.vmem_to_hbm [thread:$0]  %s502, 128, %s504, %s488
        $region64: #{tpu_custom_call.1} parent=47 // pred_fallthru
          _
      $region48: #{tpu_custom_call.1} parent=5 // pred_fallthru
        _
      %p507 = scmp.le.s32.totalorder 2, %s18
      // Predicated region
      $region65: #{tpu_custom_call.1} parent=5 // pred_check
        %p508 = pneg %p507
      $region66: #{tpu_custom_call.1} parent=5 // pred_check_branch
        %510 = sbr.rel (%p508) target = $region68
      $region67: #{tpu_custom_call.1} parent=5 // pred_region
        %s511 = ssub.s32 %s18, 2
        // Predicated region
        $region69: #{tpu_custom_call.1} parent=67 // pred_check
          %p512 = pneg %p215
        $region70: #{tpu_custom_call.1} parent=67 // pred_check_branch
          %514 = sbr.rel (%p512) target = $region72
        $region71: #{tpu_custom_call.1} parent=67 // pred_region
          %s515 = sand.u32 %s200, 1
          %s516 = scalar_lea.sflag [#allocation6], %s515
          %s517 = sand.u32 %s200, 1
          %s518 = smul.addr %s517, 8
          %s519 = scalar_lea.vmem [#allocation9], %s518
          %521 = dma.done %s516, 128
        $region72: #{tpu_custom_call.1} parent=67 // pred_fallthru
          _
      $region68: #{tpu_custom_call.1} parent=5 // pred_fallthru
        _
    $region6: #{tpu_custom_call.1} parent=1 // loop_footer
      %s22 = sadd.s32 1, %s18
    $region7: #{tpu_custom_call.1} parent=1 // loop_footer_branch
      %17 = sbr.rel target = $region3
    $region8: #{tpu_custom_call.1} parent=1 // loop_exit
      _
    %522 = vsyncpa [#allocation5], 1
    %s523 = scalar_lea.sflag [#allocation5], 1
    %524 = vsyncpa %s523, 1
    %525 = vsyncpa [#allocation8], 1
    %526 = vsyncpa [#allocation6], 1
    %s527 = scalar_lea.sflag [#allocation6], 1
    %528 = vsyncpa %s527, 1

</llo_original>
